<compile_context>
chip_gen: v7x
topology: tpu7x:2x2x1
jax: 0.10.0
libtpu: 0.0.40
codegen_flags: <defaults>
</compile_context>

<pallas_src>
import functools

import jax
import jax.numpy as jnp
from jax.experimental import pallas as pl
from jax.experimental.pallas import tpu as pltpu


def _round_up(x, m):
    return (x + m - 1) // m * m


def _layernorm_epilogue(y, ga, gb, d_valid, eps, approx):
    """Encoder-level LayerNorm over the last (feature) axis.

    Only the first `d_valid` lanes are real features (rest is padding).
    torch.Tensor.std is the unbiased estimator (divide by N-1) and the module
    adds eps to std (not to var).
    """
    lane = jax.lax.broadcasted_iota(jnp.int32, y.shape, 1)
    valid = lane < d_valid
    yv = jnp.where(valid, y, 0.0)
    mean = jnp.sum(yv, axis=-1, keepdims=True) * (1.0 / d_valid)
    diff = jnp.where(valid, y - mean, 0.0)
    var = jnp.sum(diff * diff, axis=-1, keepdims=True) * (1.0 / (d_valid - 1))
    std = jnp.sqrt(var)
    inv = pl.reciprocal(std + eps, approx=approx)     # EUP, not a VALU divide
    return diff * (ga * inv) + gb


def encoder_ffn_resident_kernel(x_ref, w1_ref, b1_ref, w2_ref, b2_ref,
                                ga_ref, gb_ref, o_ref, *, d_valid, eps, approx):
    """Weights fully VMEM-resident: grid = (row tiles,) only."""
    cdt = w1_ref.dtype
    x = x_ref[...].astype(cdt)                         # cast in-kernel (f32 -> bf16 ok)
    h = jnp.dot(x, w1_ref[...], preferred_element_type=jnp.float32)
    h = jnp.maximum(h + b1_ref[...], 0.0).astype(cdt)  # fused bias+ReLU+cast
    y = jnp.dot(h, w2_ref[...], preferred_element_type=jnp.float32) + b2_ref[...]
    o_ref[...] = _layernorm_epilogue(
        y, ga_ref[...], gb_ref[...], d_valid, eps, approx).astype(o_ref.dtype)


def encoder_ffn_chunked_kernel(x_ref, w1_ref, b1_ref, w2_ref, b2_ref,
                               ga_ref, gb_ref, o_ref, acc_ref,
                               *, d_valid, eps, approx):
    """Fallback when weights do not fit VMEM.

    grid = (row tiles [parallel], d_ff chunks [arbitrary, reduction]).
    acc_ref: (tm, dm_p) f32 accumulator, resident across the d_ff axis.
    """
    kf = pl.program_id(1)

    @pl.when(kf == 0)
    def _init():
        acc_ref[...] = jnp.zeros_like(acc_ref)

    cdt = w1_ref.dtype
    x = x_ref[...].astype(cdt)
    h = jnp.dot(x, w1_ref[...], preferred_element_type=jnp.float32)
    h = jnp.maximum(h + b1_ref[...], 0.0).astype(cdt)  # fused bias+ReLU+cast
    acc_ref[...] += jnp.dot(h, w2_ref[...], preferred_element_type=jnp.float32)

    @pl.when(kf == pl.num_programs(1) - 1)
    def _finalize():
        y = acc_ref[...] + b2_ref[...]
        o_ref[...] = _layernorm_epilogue(
            y, ga_ref[...], gb_ref[...], d_valid, eps, approx).astype(o_ref.dtype)


def _vmem_budget_bytes():
    """Per-core VMEM budget with headroom for Mosaic internal scratch."""
    try:
        cap = int(pltpu.get_tpu_info().vmem_capacity_bytes)
    except Exception:
        cap = 64 << 20                     # conservative (v7x-sized) fallback
    # ~112 MiB on v5e/v6e (128 MiB physical), ~48 MiB on v7x (64 MiB physical)
    return max(cap - (16 << 20), 32 << 20)


def _resident_need(tm, dm_p, dff_p, xby, oby, cby):
    return int(2 * tm * dm_p * xby         # x tile (double buffered)
               + 2 * tm * dm_p * oby       # out tile (double buffered)
               + 2 * dm_p * dff_p * cby    # W1 (constant index; 2 buffers counted)
               + 2 * dff_p * dm_p * cby    # W2
               + 2 * dff_p * 4             # b1
               + 6 * dm_p * 4              # b2 / ln_a / ln_b
               + tm * dff_p * (4 + cby)    # h (f32 + cast copy)
               + 2 * tm * dm_p * 4)        # y / LN temporaries


def _chunked_need(tm, tf, dm_p, xby, oby, cby):
    return int(2 * tm * dm_p * xby
               + 2 * tm * dm_p * oby
               + 2 * dm_p * tf * cby       # W1 chunk (double buffered)
               + 2 * tf * dm_p * cby       # W2 chunk (double buffered)
               + 2 * tf * 4
               + 6 * dm_p * 4
               + tm * dm_p * 4             # f32 accumulator scratch
               + tm * tf * (4 + cby)       # h (f32 + cast copy)
               + 2 * tm * dm_p * 4)        # LN temporaries


def encoder_forward(x, w1, b1, w2, b2, ln_a, ln_b, *, eps=1e-6,
                    tm=512, tf=2048, compute_dtype=jnp.bfloat16,
                    force_chunked=False):
    """x: (batch, seq, d_model) -> (batch, seq, d_model).

    LayerNorm(relu(x @ w1 + b1) @ w2 + b2)   [dropout = identity in eval mode]
    """
    batch, seq, d_model = x.shape
    d_ff = w1.shape[1]
    assert d_model >= 2, "unbiased std needs at least 2 features"
    n = batch * seq
    out_dtype = x.dtype

    approx = jnp.dtype(compute_dtype) == jnp.dtype(jnp.bfloat16)

    cby = jnp.dtype(compute_dtype).itemsize
    oby = jnp.dtype(out_dtype).itemsize

    # ---- row-tile selection (lane-dense, MXU-friendly) ---------------------
    row_align = 16                              # bf16 sublane packing (also ok f32)
    n_ceil = _round_up(n, row_align)
    tm_eff = min(_round_up(tm, row_align), n_ceil)
    # v7x megacore: aim for >= 2 row tiles when enough rows exist.
    if tm_eff >= n_ceil and n_ceil >= 2 * row_align:
        tm_eff = _round_up(n_ceil // 2, row_align)

    dm_p = _round_up(d_model, 128)              # lane-dense feature axis
    dff_128 = _round_up(d_ff, 128)

    budget = _vmem_budget_bytes()

    # ---- path selection: resident weights vs chunked d_ff ------------------
    x_in_kernel_bytes = cby                     # assume wrapper cast (refined below)
    use_resident = (not force_chunked) and (
        _resident_need(tm_eff, dm_p, dff_128, 4, oby, cby) <= budget)

    if use_resident:
        dff_p = dff_128
        tf_eff = dff_p
        need = _resident_need(tm_eff, dm_p, dff_p, 4, oby, cby)
    else:
        tf_eff = min(_round_up(tf, 128), dff_128)
        while (_chunked_need(tm_eff, tf_eff, dm_p, 4, oby, cby) > budget
               and tf_eff > 128):
            tf_eff = _round_up(max(128, tf_eff // 2), 128)
        while (_chunked_need(tm_eff, tf_eff, dm_p, 4, oby, cby) > budget
               and tm_eff > row_align):
            tm_eff = _round_up(max(row_align, tm_eff // 2), row_align)
        dff_p = _round_up(d_ff, tf_eff)
        need = _chunked_need(tm_eff, tf_eff, dm_p, 4, oby, cby)

    n_p = _round_up(n, tm_eff)                  # ragged rows handled by padding
    vmem_limit = int(min(budget, max(2 * need, 32 << 20)))

    # ---- prepare inputs -----------------------------------------------------
    x2d = x.reshape(n, d_model)
    needs_pad = (n_p != n) or (dm_p != d_model)
    if needs_pad:
        # Padding forces a pre-pass anyway; fuse the cast into it.
        x2d = jnp.pad(x2d, ((0, n_p - n), (0, dm_p - d_model))).astype(compute_dtype)
    # else: feed x as-is; the kernel casts to the MXU dtype (no wrapper pre-pass).

    w1p = jnp.pad(w1, ((0, dm_p - d_model), (0, dff_p - d_ff))).astype(compute_dtype)
    b1p = jnp.pad(b1, (0, dff_p - d_ff)).reshape(1, dff_p).astype(jnp.float32)
    w2p = jnp.pad(w2, ((0, dff_p - d_ff), (0, dm_p - d_model))).astype(compute_dtype)
    b2p = jnp.pad(b2, (0, dm_p - d_model)).reshape(1, dm_p).astype(jnp.float32)
    gap = jnp.pad(ln_a, (0, dm_p - d_model)).reshape(1, dm_p).astype(jnp.float32)
    gbp = jnp.pad(ln_b, (0, dm_p - d_model)).reshape(1, dm_p).astype(jnp.float32)

    if use_resident:
        kernel = functools.partial(encoder_ffn_resident_kernel,
                                   d_valid=d_model, eps=eps, approx=approx)
        grid = (n_p // tm_eff,)
        in_specs = [
            pl.BlockSpec((tm_eff, dm_p), lambda i: (i, 0)),   # x rows
            pl.BlockSpec((dm_p, dff_p), lambda i: (0, 0)),    # W1 (resident)
            pl.BlockSpec((1, dff_p), lambda i: (0, 0)),       # b1
            pl.BlockSpec((dff_p, dm_p), lambda i: (0, 0)),    # W2 (resident)
            pl.BlockSpec((1, dm_p), lambda i: (0, 0)),        # b2
            pl.BlockSpec((1, dm_p), lambda i: (0, 0)),        # LN a_2
            pl.BlockSpec((1, dm_p), lambda i: (0, 0)),        # LN b_2
        ]
        out_specs = pl.BlockSpec((tm_eff, dm_p), lambda i: (i, 0))
        scratch_shapes = []
        dim_sem = ("parallel",)
    else:
        kernel = functools.partial(encoder_ffn_chunked_kernel,
                                   d_valid=d_model, eps=eps, approx=approx)
        grid = (n_p // tm_eff, dff_p // tf_eff)
        in_specs = [
            pl.BlockSpec((tm_eff, dm_p), lambda i, kf: (i, 0)),    # x rows
            pl.BlockSpec((dm_p, tf_eff), lambda i, kf: (0, kf)),   # W1 chunk
            pl.BlockSpec((1, tf_eff), lambda i, kf: (0, kf)),      # b1 chunk
            pl.BlockSpec((tf_eff, dm_p), lambda i, kf: (kf, 0)),   # W2 chunk
            pl.BlockSpec((1, dm_p), lambda i, kf: (0, 0)),         # b2
            pl.BlockSpec((1, dm_p), lambda i, kf: (0, 0)),         # LN a_2
            pl.BlockSpec((1, dm_p), lambda i, kf: (0, 0)),         # LN b_2
        ]
        out_specs = pl.BlockSpec((tm_eff, dm_p), lambda i, kf: (i, 0))
        scratch_shapes = [pltpu.VMEM((tm_eff, dm_p), jnp.float32)]
        dim_sem = ("parallel", "arbitrary")

    out2d = pl.pallas_call(
        kernel,
        out_shape=jax.ShapeDtypeStruct((n_p, dm_p), out_dtype),
        grid_spec=pltpu.PrefetchScalarGridSpec(
            num_scalar_prefetch=0,
            grid=grid,
            in_specs=in_specs,
            out_specs=out_specs,
            scratch_shapes=scratch_shapes),
        compiler_params=pltpu.CompilerParams(
            dimension_semantics=dim_sem,
            vmem_limit_bytes=vmem_limit),
    )(x2d, w1p, b1p, w2p, b2p, gap, gbp)

    return out2d[:n, :d_model].reshape(batch, seq, d_model)


if __name__ == "__main__":
    # Small shapes consistent with the module: d_model=32, d_ff=64.
    batch, seq, d_model, d_ff = 2, 8, 32, 64
    eps = 1e-6

    key = jax.random.PRNGKey(0)
    kx, kp, kp2 = jax.random.split(key, 3)

    x = jax.random.normal(kx, (batch, seq, d_model), dtype=jnp.float32)

    def make_ffn_params(k, dm, dff):
        k1, k2, k3, k4, k5, k6 = jax.random.split(k, 6)
        lim1 = 1.0 / (dm ** 0.5)
        lim2 = 1.0 / (dff ** 0.5)
        w1 = jax.random.uniform(k1, (dm, dff), jnp.float32, -lim1, lim1)
        b1 = jax.random.uniform(k2, (dff,), jnp.float32, -lim1, lim1)
        w2 = jax.random.uniform(k3, (dff, dm), jnp.float32, -lim2, lim2)
        b2 = jax.random.uniform(k4, (dm,), jnp.float32, -lim2, lim2)
        # Encoder-level LayerNorm params (module inits to ones/zeros; random
        # here so the affine transform is actually exercised by the check).
        ln_a = 1.0 + 0.1 * jax.random.normal(k5, (dm,), jnp.float32)
        ln_b = 0.1 * jax.random.normal(k6, (dm,), jnp.float32)
        return w1, b1, w2, b2, ln_a, ln_b

    def ref_fn(xx, w1, b1, w2, b2, ln_a, ln_b):
        y = jnp.maximum(xx @ w1 + b1, 0.0) @ w2 + b2
        mean = y.mean(-1, keepdims=True)
        std = jnp.std(y, axis=-1, keepdims=True, ddof=1)   # torch.std: unbiased
        return ln_a * (y - mean) / (std + eps) + ln_b

    params = make_ffn_params(kp, d_model, d_ff)
    ref = ref_fn(x, *params)

    # 1) f32 datapath (resident weights), exact reciprocal: tight check.
    out_f32 = jax.block_until_ready(
        encoder_forward(x, *params, eps=eps, compute_dtype=jnp.float32))
    assert out_f32.shape == (batch, seq, d_model)
    err = float(jnp.max(jnp.abs(out_f32 - ref)))
    assert jnp.allclose(out_f32, ref, atol=1e-3, rtol=1e-3), (
        "f32 resident path mismatch, max err %e" % err)

    # 2) bf16 MXU datapath (production path), approx reciprocal: looser check.
    out_bf16 = jax.block_until_ready(
        encoder_forward(x, *params, eps=eps, compute_dtype=jnp.bfloat16))
    assert out_bf16.shape == (batch, seq, d_model)
    err = float(jnp.max(jnp.abs(out_bf16 - ref)))
    assert jnp.allclose(out_bf16, ref, atol=5e-2, rtol=5e-2), (
        "bf16 resident path mismatch, max err %e" % err)

    # 3) chunked fallback path (forced), d_ff large enough for >1 chunk.
    d_ff2 = 256
    params2 = make_ffn_params(kp2, d_model, d_ff2)
    ref2 = ref_fn(x, *params2)
    out_chunked = jax.block_until_ready(
        encoder_forward(x, *params2, eps=eps, compute_dtype=jnp.float32,
                        tf=128, force_chunked=True))
    assert out_chunked.shape == (batch, seq, d_model)
    err = float(jnp.max(jnp.abs(out_chunked - ref2)))
    assert jnp.allclose(out_chunked, ref2, atol=1e-3, rtol=1e-3), (
        "chunked path mismatch, max err %e" % err)

    print("KERNEL_OK")
</pallas_src>

<mosaic_0001>
module attributes {stable_mosaic.version = 11 : i64} {
  func.func @encoder_ffn_resident_kernel(%arg0: i32, %arg1: memref<16x128xf32, #tpu.memory_space<vmem>>, %arg2: memref<128x128xf32, #tpu.memory_space<vmem>>, %arg3: memref<1x128xf32, #tpu.memory_space<vmem>>, %arg4: memref<128x128xf32, #tpu.memory_space<vmem>>, %arg5: memref<1x128xf32, #tpu.memory_space<vmem>>, %arg6: memref<1x128xf32, #tpu.memory_space<vmem>>, %arg7: memref<1x128xf32, #tpu.memory_space<vmem>>, %arg8: memref<16x128xf32, #tpu.memory_space<vmem>>) attributes {dimension_semantics = [#tpu.dimension_semantics<parallel>], iteration_bounds = array<i64: 1>, scalar_prefetch = 0 : i64, scratch_operands = 0 : i64, tpu.core_type = #tpu.core_type<tc>, window_params = [{transform_indices = @transform_0, window_bounds = array<i64: 16, 128>}, {pipeline_mode = #tpu.pipeline_mode<synchronous>, transform_indices = @transform_1, window_bounds = array<i64: 128, 128>}, {pipeline_mode = #tpu.pipeline_mode<synchronous>, transform_indices = @transform_2, window_bounds = array<i64: 1, 128>}, {pipeline_mode = #tpu.pipeline_mode<synchronous>, transform_indices = @transform_3, window_bounds = array<i64: 128, 128>}, {pipeline_mode = #tpu.pipeline_mode<synchronous>, transform_indices = @transform_4, window_bounds = array<i64: 1, 128>}, {pipeline_mode = #tpu.pipeline_mode<synchronous>, transform_indices = @transform_5, window_bounds = array<i64: 1, 128>}, {pipeline_mode = #tpu.pipeline_mode<synchronous>, transform_indices = @transform_6, window_bounds = array<i64: 1, 128>}, {transform_indices = @transform_7, window_bounds = array<i64: 16, 128>}]} {
    %c0 = arith.constant 0 : index
    %c0_0 = arith.constant 0 : index
    %0 = vector.load %arg1[%c0, %c0_0] : memref<16x128xf32, #tpu.memory_space<vmem>>, vector<16x128xf32>
    %c0_1 = arith.constant 0 : index
    %c0_2 = arith.constant 0 : index
    %1 = vector.load %arg2[%c0_1, %c0_2] : memref<128x128xf32, #tpu.memory_space<vmem>>, vector<128x128xf32>
    %cst = arith.constant dense<0.000000e+00> : vector<16x128xf32>
    %2 = tpu.matmul %0, %1, %cst {dimension_numbers = #tpu.dot_dimension_numbers<[1], [0], [0], [1], [0, 0, 1, 1], [], []>} : vector<16x128xf32>, vector<128x128xf32>, vector<16x128xf32> -> vector<16x128xf32>
    %c0_3 = arith.constant 0 : index
    %c0_4 = arith.constant 0 : index
    %3 = vector.load %arg3[%c0_3, %c0_4] : memref<1x128xf32, #tpu.memory_space<vmem>>, vector<1x128xf32>
    %4 = vector.broadcast %3 : vector<1x128xf32> to vector<16x128xf32>
    %5 = arith.addf %2, %4 : vector<16x128xf32>
    %cst_5 = arith.constant 0.000000e+00 : f32
    %6 = vector.broadcast %cst_5 : f32 to vector<16x128xf32>
    %7 = arith.maximumf %5, %6 : vector<16x128xf32>
    %c0_6 = arith.constant 0 : index
    %c0_7 = arith.constant 0 : index
    %8 = vector.load %arg4[%c0_6, %c0_7] : memref<128x128xf32, #tpu.memory_space<vmem>>, vector<128x128xf32>
    %cst_8 = arith.constant dense<0.000000e+00> : vector<16x128xf32>
    %9 = tpu.matmul %7, %8, %cst_8 {dimension_numbers = #tpu.dot_dimension_numbers<[1], [0], [0], [1], [0, 0, 1, 1], [], []>} : vector<16x128xf32>, vector<128x128xf32>, vector<16x128xf32> -> vector<16x128xf32>
    %c0_9 = arith.constant 0 : index
    %c0_10 = arith.constant 0 : index
    %10 = vector.load %arg5[%c0_9, %c0_10] : memref<1x128xf32, #tpu.memory_space<vmem>>, vector<1x128xf32>
    %11 = vector.broadcast %10 : vector<1x128xf32> to vector<16x128xf32>
    %12 = arith.addf %9, %11 : vector<16x128xf32>
    %c0_11 = arith.constant 0 : index
    %c0_12 = arith.constant 0 : index
    %13 = vector.load %arg6[%c0_11, %c0_12] : memref<1x128xf32, #tpu.memory_space<vmem>>, vector<1x128xf32>
    %c0_13 = arith.constant 0 : index
    %c0_14 = arith.constant 0 : index
    %14 = vector.load %arg7[%c0_13, %c0_14] : memref<1x128xf32, #tpu.memory_space<vmem>>, vector<1x128xf32>
    %15 = tpu.iota {dimensions = array<i32: 1>} : vector<16x128xi32>
    %c32_i32 = arith.constant 32 : i32
    %16 = vector.broadcast %c32_i32 : i32 to vector<16x128xi32>
    %17 = arith.cmpi slt, %15, %16 : vector<16x128xi32>
    %cst_15 = arith.constant 0.000000e+00 : f32
    %18 = vector.broadcast %cst_15 : f32 to vector<16x128xf32>
    %19 = arith.select %17, %12, %18 : vector<16x128xi1>, vector<16x128xf32>
    %cst_16 = arith.constant dense<0.000000e+00> : vector<16xf32>
    %20 = vector.multi_reduction <add>, %19, %cst_16 [1] : vector<16x128xf32> to vector<16xf32>
    %21 = vector.shape_cast %20 : vector<16xf32> to vector<16x1xf32>
    %cst_17 = arith.constant 3.125000e-02 : f32
    %22 = vector.broadcast %cst_17 : f32 to vector<16x1xf32>
    %23 = arith.mulf %21, %22 : vector<16x1xf32>
    %24 = vector.broadcast %23 : vector<16x1xf32> to vector<16x128xf32>
    %25 = arith.subf %12, %24 : vector<16x128xf32>
    %cst_18 = arith.constant 0.000000e+00 : f32
    %26 = vector.broadcast %cst_18 : f32 to vector<16x128xf32>
    %27 = arith.select %17, %25, %26 : vector<16x128xi1>, vector<16x128xf32>
    %28 = arith.mulf %27, %27 : vector<16x128xf32>
    %cst_19 = arith.constant dense<0.000000e+00> : vector<16xf32>
    %29 = vector.multi_reduction <add>, %28, %cst_19 [1] : vector<16x128xf32> to vector<16xf32>
    %30 = vector.shape_cast %29 : vector<16xf32> to vector<16x1xf32>
    %cst_20 = arith.constant 0.0322580636 : f32
    %31 = vector.broadcast %cst_20 : f32 to vector<16x1xf32>
    %32 = arith.mulf %30, %31 : vector<16x1xf32>
    %33 = math.sqrt %32 : vector<16x1xf32>
    %cst_21 = arith.constant 9.99999997E-7 : f32
    %34 = vector.broadcast %cst_21 : f32 to vector<16x1xf32>
    %35 = arith.addf %33, %34 : vector<16x1xf32>
    %36 = tpu.reciprocal %35 : vector<16x1xf32> -> vector<16x1xf32>
    %37 = vector.broadcast %13 : vector<1x128xf32> to vector<16x128xf32>
    %38 = vector.broadcast %36 : vector<16x1xf32> to vector<16x128xf32>
    %39 = arith.mulf %37, %38 : vector<16x128xf32>
    %40 = arith.mulf %27, %39 : vector<16x128xf32>
    %41 = vector.broadcast %14 : vector<1x128xf32> to vector<16x128xf32>
    %42 = arith.addf %40, %41 : vector<16x128xf32>
    %c0_22 = arith.constant 0 : index
    %c0_23 = arith.constant 0 : index
    %43 = vector.load %arg8[%c0_22, %c0_23] : memref<16x128xf32, #tpu.memory_space<vmem>>, vector<16x128xf32>
    tpu.vector_store %arg8[%c0_22, %c0_23], %42 {strides = array<i32>} : memref<16x128xf32, #tpu.memory_space<vmem>>, vector<16x128xf32>,
    return
  }
  func.func @transform_0(%arg0: i32) -> (i32, i32) {
    %c0_i32 = arith.constant 0 : i32
    %c0_i32_0 = arith.constant 0 : i32
    return %arg0, %c0_i32 : i32, i32
  }
  func.func @transform_1(%arg0: i32) -> (i32, i32) {
    %c0_i32 = arith.constant 0 : i32
    %c0_i32_0 = arith.constant 0 : i32
    %c0_i32_1 = arith.constant 0 : i32
    return %c0_i32, %c0_i32_0 : i32, i32
  }
  func.func @transform_2(%arg0: i32) -> (i32, i32) {
    %c0_i32 = arith.constant 0 : i32
    %c0_i32_0 = arith.constant 0 : i32
    %c0_i32_1 = arith.constant 0 : i32
    return %c0_i32, %c0_i32_0 : i32, i32
  }
  func.func @transform_3(%arg0: i32) -> (i32, i32) {
    %c0_i32 = arith.constant 0 : i32
    %c0_i32_0 = arith.constant 0 : i32
    %c0_i32_1 = arith.constant 0 : i32
    return %c0_i32, %c0_i32_0 : i32, i32
  }
  func.func @transform_4(%arg0: i32) -> (i32, i32) {
    %c0_i32 = arith.constant 0 : i32
    %c0_i32_0 = arith.constant 0 : i32
    %c0_i32_1 = arith.constant 0 : i32
    return %c0_i32, %c0_i32_0 : i32, i32
  }
  func.func @transform_5(%arg0: i32) -> (i32, i32) {
    %c0_i32 = arith.constant 0 : i32
    %c0_i32_0 = arith.constant 0 : i32
    %c0_i32_1 = arith.constant 0 : i32
    return %c0_i32, %c0_i32_0 : i32, i32
  }
  func.func @transform_6(%arg0: i32) -> (i32, i32) {
    %c0_i32 = arith.constant 0 : i32
    %c0_i32_0 = arith.constant 0 : i32
    %c0_i32_1 = arith.constant 0 : i32
    return %c0_i32, %c0_i32_0 : i32, i32
  }
  func.func @transform_7(%arg0: i32) -> (i32, i32) {
    %c0_i32 = arith.constant 0 : i32
    %c0_i32_0 = arith.constant 0 : i32
    return %arg0, %c0_i32 : i32, i32
  }
}

</mosaic_0001>

<llo_original>
// kernel: tpu_custom_call.1
$region0: #{tpu_custom_call.1}
  #allocation0 [shape = 'u32[]', space=smem, size = 0x4, offset = 0x4, fixed_abs, tag = 'smem constant byte address 0x4 - core index']
  #allocation1 [shape = 'u32[144,128]{1,0:T(1,128)}', space=vmem, size = 0x12000, scoped, tag = 'internal scratch']
  %s0 = inlined_call_operand.hbm [shape: f32[16,128], index: 0, kind: input, shape index: {}]
  %s1 = inlined_call_operand.hbm [shape: f32[128,128], index: 1, kind: input, shape index: {}]
  %s2 = inlined_call_operand.vmem [shape: f32[1,128], index: 2, kind: input, shape index: {}]
  %s3 = inlined_call_operand.hbm [shape: f32[128,128], index: 3, kind: input, shape index: {}]
  %s4 = inlined_call_operand.vmem [shape: f32[1,128], index: 4, kind: input, shape index: {}]
  %s5 = inlined_call_operand.vmem [shape: f32[1,128], index: 5, kind: input, shape index: {}]
  %s6 = inlined_call_operand.vmem [shape: f32[1,128], index: 6, kind: input, shape index: {}]
  %s7 = inlined_call_operand.hbm [shape: f32[16,128], index: 7, kind: output, shape index: {}]
  %s8 = sld [smem:[#allocation0]]
  $region50: #{tpu_custom_call.1} parent=0
    _
  %s10 = ssub.s32 1, %s8
  %s11 = scalar_select 0, %s10, %s8
  $region1: #{tpu_custom_call.1} parent=0
    #allocation2 [shape = 'u8[8192]{0}', space=vmem, size = 0x2000, scoped, tag = 'input window, operand 0, single buffered']
    #allocation3 [shape = 's32[1]{0}', space=sflag, size = 0x4, scoped, tag = 'scoped memory for tpu_custom_call.1']
    #allocation4 [shape = 's32[1]{0}', space=sflag, size = 0x4, scoped, tag = 'scoped memory for tpu_custom_call.1']
    #allocation5 [shape = 'u8[65536]{0}', space=vmem, size = 0x10000, scoped, tag = 'input window, operand 1, single buffered']
    #allocation6 [shape = 's32[1]{0}', space=sflag, size = 0x4, scoped, tag = 'scoped memory for tpu_custom_call.1']
    #allocation7 [shape = 'u8[65536]{0}', space=vmem, size = 0x10000, scoped, tag = 'input window, operand 3, single buffered']
    #allocation8 [shape = 'u8[8192]{0}', space=vmem, size = 0x2000, scoped, tag = 'output window, operand 0, single buffered']
    %12 = vsyncpa [#allocation3], 0
    %13 = vsyncpa [#allocation6], 0
    %14 = vsyncpa [#allocation4], 0
    // Predicated region
    $region2: #{tpu_custom_call.1} parent=1 // pred_check
      _
    $region3: #{tpu_custom_call.1} parent=1 // pred_check_branch
      %16 = sbr.rel (0) target = $region5
    $region4: #{tpu_custom_call.1} parent=1 // pred_region
      %s18 = ssub.s32 256, 256
      %19 = vsyncadd [#allocation3], %s18
      %s20 = sshll.u32 [#allocation2], 4
      %s21 = int_to_ptr.vmem [resolvable:$true] %s20
      %26 = dma.hbm_to_vmem [thread:$0]  %s0, 256, %s21, [#allocation3], 128, 128, 8
    $region5: #{tpu_custom_call.1} parent=1 // pred_fallthru
      _
    // Predicated region
    $region6: #{tpu_custom_call.1} parent=1 // pred_check
      _
    $region7: #{tpu_custom_call.1} parent=1 // pred_check_branch
      %28 = sbr.rel (0) target = $region9
    $region8: #{tpu_custom_call.1} parent=1 // pred_region
      %s30 = ssub.s32 2048, 2048
      %31 = vsyncadd [#allocation6], %s30
      %s32 = sshll.u32 [#allocation5], 4
      %s33 = int_to_ptr.vmem [resolvable:$true] %s32
      %38 = dma.hbm_to_vmem [thread:$0]  %s1, 2048, %s33, [#allocation6], 128, 128, 8
    $region9: #{tpu_custom_call.1} parent=1 // pred_fallthru
      _
    // Predicated region
    $region10: #{tpu_custom_call.1} parent=1 // pred_check
      _
    $region11: #{tpu_custom_call.1} parent=1 // pred_check_branch
      %40 = sbr.rel (0) target = $region13
    $region12: #{tpu_custom_call.1} parent=1 // pred_region
      _
    $region13: #{tpu_custom_call.1} parent=1 // pred_fallthru
      _
    // Predicated region
    $region14: #{tpu_custom_call.1} parent=1 // pred_check
      _
    $region15: #{tpu_custom_call.1} parent=1 // pred_check_branch
      %42 = sbr.rel (0) target = $region17
    $region16: #{tpu_custom_call.1} parent=1 // pred_region
      %s44 = ssub.s32 2048, 2048
      %45 = vsyncadd [#allocation6], %s44
      %s46 = sshll.u32 [#allocation7], 4
      %s47 = int_to_ptr.vmem [resolvable:$true] %s46
      %52 = dma.hbm_to_vmem [thread:$0]  %s3, 2048, %s47, [#allocation6], 128, 128, 8
    $region17: #{tpu_custom_call.1} parent=1 // pred_fallthru
      _
    // Predicated region
    $region18: #{tpu_custom_call.1} parent=1 // pred_check
      _
    $region19: #{tpu_custom_call.1} parent=1 // pred_check_branch
      %54 = sbr.rel (0) target = $region21
    $region20: #{tpu_custom_call.1} parent=1 // pred_region
      _
    $region21: #{tpu_custom_call.1} parent=1 // pred_fallthru
      _
    // Predicated region
    $region22: #{tpu_custom_call.1} parent=1 // pred_check
      _
    $region23: #{tpu_custom_call.1} parent=1 // pred_check_branch
      %56 = sbr.rel (0) target = $region25
    $region24: #{tpu_custom_call.1} parent=1 // pred_region
      _
    $region25: #{tpu_custom_call.1} parent=1 // pred_fallthru
      _
    // Predicated region
    $region26: #{tpu_custom_call.1} parent=1 // pred_check
      _
    $region27: #{tpu_custom_call.1} parent=1 // pred_check_branch
      %58 = sbr.rel (0) target = $region29
    $region28: #{tpu_custom_call.1} parent=1 // pred_region
      _
    $region29: #{tpu_custom_call.1} parent=1 // pred_fallthru
      _
    // Predicated region
    $region30: #{tpu_custom_call.1} parent=1 // pred_check
      _
    $region31: #{tpu_custom_call.1} parent=1 // pred_check_branch
      %60 = sbr.rel (0) target = $region33
    $region32: #{tpu_custom_call.1} parent=1 // pred_region
      %61 = dma.done [#allocation3], 256
    $region33: #{tpu_custom_call.1} parent=1 // pred_fallthru
      _
    // Predicated region
    $region34: #{tpu_custom_call.1} parent=1 // pred_check
      _
    $region35: #{tpu_custom_call.1} parent=1 // pred_check_branch
      %63 = sbr.rel (0) target = $region37
    $region36: #{tpu_custom_call.1} parent=1 // pred_region
      %64 = dma.done [#allocation6], 2048
    $region37: #{tpu_custom_call.1} parent=1 // pred_fallthru
      _
    // Predicated region
    $region38: #{tpu_custom_call.1} parent=1 // pred_check
      _
    $region39: #{tpu_custom_call.1} parent=1 // pred_check_branch
      %66 = sbr.rel (0) target = $region41
    $region40: #{tpu_custom_call.1} parent=1 // pred_region
      %67 = dma.done [#allocation6], 2048
    $region41: #{tpu_custom_call.1} parent=1 // pred_fallthru
      _
    %v68 = vld [vmem:[#allocation2] sm:$0xff]
    %v69 = vld [vmem:[#allocation2 + $0x8] sm:$0xff]
    %v70 = vld [vmem:[#allocation5] sm:$0xff]
    %v71 = vld [vmem:[#allocation5 + $0x8] sm:$0xff]
    %v72 = vld [vmem:[#allocation5 + $0x10] sm:$0xff]
    %v73 = vld [vmem:[#allocation5 + $0x18] sm:$0xff]
    %v74 = vld [vmem:[#allocation5 + $0x20] sm:$0xff]
    %v75 = vld [vmem:[#allocation5 + $0x28] sm:$0xff]
    %v76 = vld [vmem:[#allocation5 + $0x30] sm:$0xff]
    %v77 = vld [vmem:[#allocation5 + $0x38] sm:$0xff]
    %v78 = vld [vmem:[#allocation5 + $0x40] sm:$0xff]
    %v79 = vld [vmem:[#allocation5 + $0x48] sm:$0xff]
    %v80 = vld [vmem:[#allocation5 + $0x50] sm:$0xff]
    %v81 = vld [vmem:[#allocation5 + $0x58] sm:$0xff]
    %v82 = vld [vmem:[#allocation5 + $0x60] sm:$0xff]
    %v83 = vld [vmem:[#allocation5 + $0x68] sm:$0xff]
    %v84 = vld [vmem:[#allocation5 + $0x70] sm:$0xff]
    %v85 = vld [vmem:[#allocation5 + $0x78] sm:$0xff]
    %v86 = vld [vmem:[%s2] sm:$0x1]
    %v88 = vlaneseq
    %v89 = vshrl.u32 %v88, 7
    %v90 = vsub.s32 0, %v89
    %v91 = vrot.slane %v86, %v90
    %93 = vmatprep.subr.mxu0 0.0
    %94 = vmatpush1.msra.mxu0 %v70
    %95 = vmatprep.subr.mxu0 0.0
    %96 = vmatpush1.msra.mxu0 %v71
    %97 = vmatprep.subr.mxu0 0.0
    %98 = vmatpush1.msra.mxu0 %v72
    %99 = vmatprep.subr.mxu0 0.0
    %100 = vmatpush1.msra.mxu0 %v73
    %101 = vmatprep.subr.mxu0 0.0
    %102 = vmatpush1.msra.mxu0 %v74
    %103 = vmatprep.subr.mxu0 0.0
    %104 = vmatpush1.msra.mxu0 %v75
    %105 = vmatprep.subr.mxu0 0.0
    %106 = vmatpush1.msra.mxu0 %v76
    %107 = vmatprep.subr.mxu0 0.0
    %108 = vmatpush1.msra.mxu0 %v77
    %109 = vmatprep.subr.mxu0 0.0
    %110 = vmatpush1.msra.mxu0 %v78
    %111 = vmatprep.subr.mxu0 0.0
    %112 = vmatpush1.msra.mxu0 %v79
    %113 = vmatprep.subr.mxu0 0.0
    %114 = vmatpush1.msra.mxu0 %v80
    %115 = vmatprep.subr.mxu0 0.0
    %116 = vmatpush1.msra.mxu0 %v81
    %117 = vmatprep.subr.mxu0 0.0
    %118 = vmatpush1.msra.mxu0 %v82
    %119 = vmatprep.subr.mxu0 0.0
    %120 = vmatpush1.msra.mxu0 %v83
    %121 = vmatprep.subr.mxu0 0.0
    %122 = vmatpush1.msra.mxu0 %v84
    %123 = vmatprep.subr.mxu0 0.0
    %124 = vmatpush1.msra.mxu0 %v85
    %125 = vmatprep.subr.mxu0 0.0
    %126 = vmatpush1.msra.mxu0 0.0
    %127 = vmatprep.subr.mxu0 0.0
    %128 = vmatpush1.msra.mxu0 0.0
    %129 = vmatprep.subr.mxu0 0.0
    %130 = vmatpush1.msra.mxu0 0.0
    %131 = vmatprep.subr.mxu0 0.0
    %132 = vmatpush1.msra.mxu0 0.0
    %133 = vmatprep.subr.mxu0 0.0
    %134 = vmatpush1.msra.mxu0 0.0
    %135 = vmatprep.subr.mxu0 0.0
    %136 = vmatpush1.msra.mxu0 0.0
    %137 = vmatprep.subr.mxu0 0.0
    %138 = vmatpush1.msra.mxu0 0.0
    %139 = vmatprep.subr.mxu0 0.0
    %140 = vmatpush1.msra.mxu0 0.0
    %141 = vmatprep.subr.mxu0 0.0
    %142 = vmatpush1.msra.mxu0 0.0
    %143 = vmatprep.subr.mxu0 0.0
    %144 = vmatpush1.msra.mxu0 0.0
    %145 = vmatprep.subr.mxu0 0.0
    %146 = vmatpush1.msra.mxu0 0.0
    %147 = vmatprep.subr.mxu0 0.0
    %148 = vmatpush1.msra.mxu0 0.0
    %149 = vmatprep.subr.mxu0 0.0
    %150 = vmatpush1.msra.mxu0 0.0
    %151 = vmatprep.subr.mxu0 0.0
    %152 = vmatpush1.msra.mxu0 0.0
    %153 = vmatprep.subr.mxu0 0.0
    %154 = vmatpush1.msra.mxu0 0.0
    %155 = vmatprep.subr.mxu0 0.0
    %156 = vmatpush1.msra.mxu0 0.0
    %157 = vmatprep.mubr.f32.mxu0 0.0
    %158 = vmatmul.mubr.f32.gmra.mrb[0].mxu0 %v68
    %v159 = vpop.f32.mrb[0].mxu0
    %v160 = vadd.f32 %v91, %v159
    %v161 = vpop.f32.mrb[0].mxu0
    %162 = vmatprep.mubr.f32.mxu0 0.0
    %163 = vmatmul.mubr.f32.gmra.mrb[0].mxu0 %v69
    %v164 = vpop.f32.mrb[0].mxu0
    %v165 = vadd.f32 %v91, %v164
    %v166 = vpop.f32.mrb[0].mxu0
    %167 = vdwg.mxu0
    %v168 = vmax.f32 %v160, 0.0
    %v169 = vmax.f32 %v165, 0.0
    %v170 = vld [vmem:[#allocation7] sm:$0xff]
    %v171 = vld [vmem:[#allocation7 + $0x8] sm:$0xff]
    %v172 = vld [vmem:[#allocation7 + $0x10] sm:$0xff]
    %v173 = vld [vmem:[#allocation7 + $0x18] sm:$0xff]
    %v174 = vld [vmem:[#allocation7 + $0x20] sm:$0xff]
    %v175 = vld [vmem:[#allocation7 + $0x28] sm:$0xff]
    %v176 = vld [vmem:[#allocation7 + $0x30] sm:$0xff]
    %v177 = vld [vmem:[#allocation7 + $0x38] sm:$0xff]
    %v178 = vld [vmem:[#allocation7 + $0x40] sm:$0xff]
    %v179 = vld [vmem:[#allocation7 + $0x48] sm:$0xff]
    %v180 = vld [vmem:[#allocation7 + $0x50] sm:$0xff]
    %v181 = vld [vmem:[#allocation7 + $0x58] sm:$0xff]
    %v182 = vld [vmem:[#allocation7 + $0x60] sm:$0xff]
    %v183 = vld [vmem:[#allocation7 + $0x68] sm:$0xff]
    %v184 = vld [vmem:[#allocation7 + $0x70] sm:$0xff]
    %v185 = vld [vmem:[#allocation7 + $0x78] sm:$0xff]
    %v186 = vld [vmem:[%s4] sm:$0x1]
    %v188 = vlaneseq
    %v189 = vshrl.u32 %v188, 7
    %v190 = vsub.s32 0, %v189
    %v191 = vrot.slane %v186, %v190
    %193 = vmatprep.subr.mxu0 0.0
    %194 = vmatpush1.msra.mxu0 %v170
    %195 = vmatprep.subr.mxu0 0.0
    %196 = vmatpush1.msra.mxu0 %v171
    %197 = vmatprep.subr.mxu0 0.0
    %198 = vmatpush1.msra.mxu0 %v172
    %199 = vmatprep.subr.mxu0 0.0
    %200 = vmatpush1.msra.mxu0 %v173
    %201 = vmatprep.subr.mxu0 0.0
    %202 = vmatpush1.msra.mxu0 %v174
    %203 = vmatprep.subr.mxu0 0.0
    %204 = vmatpush1.msra.mxu0 %v175
    %205 = vmatprep.subr.mxu0 0.0
    %206 = vmatpush1.msra.mxu0 %v176
    %207 = vmatprep.subr.mxu0 0.0
    %208 = vmatpush1.msra.mxu0 %v177
    %209 = vmatprep.subr.mxu0 0.0
    %210 = vmatpush1.msra.mxu0 %v178
    %211 = vmatprep.subr.mxu0 0.0
    %212 = vmatpush1.msra.mxu0 %v179
    %213 = vmatprep.subr.mxu0 0.0
    %214 = vmatpush1.msra.mxu0 %v180
    %215 = vmatprep.subr.mxu0 0.0
    %216 = vmatpush1.msra.mxu0 %v181
    %217 = vmatprep.subr.mxu0 0.0
    %218 = vmatpush1.msra.mxu0 %v182
    %219 = vmatprep.subr.mxu0 0.0
    %220 = vmatpush1.msra.mxu0 %v183
    %221 = vmatprep.subr.mxu0 0.0
    %222 = vmatpush1.msra.mxu0 %v184
    %223 = vmatprep.subr.mxu0 0.0
    %224 = vmatpush1.msra.mxu0 %v185
    %225 = vmatprep.subr.mxu0 0.0
    %226 = vmatpush1.msra.mxu0 0.0
    %227 = vmatprep.subr.mxu0 0.0
    %228 = vmatpush1.msra.mxu0 0.0
    %229 = vmatprep.subr.mxu0 0.0
    %230 = vmatpush1.msra.mxu0 0.0
    %231 = vmatprep.subr.mxu0 0.0
    %232 = vmatpush1.msra.mxu0 0.0
    %233 = vmatprep.subr.mxu0 0.0
    %234 = vmatpush1.msra.mxu0 0.0
    %235 = vmatprep.subr.mxu0 0.0
    %236 = vmatpush1.msra.mxu0 0.0
    %237 = vmatprep.subr.mxu0 0.0
    %238 = vmatpush1.msra.mxu0 0.0
    %239 = vmatprep.subr.mxu0 0.0
    %240 = vmatpush1.msra.mxu0 0.0
    %241 = vmatprep.subr.mxu0 0.0
    %242 = vmatpush1.msra.mxu0 0.0
    %243 = vmatprep.subr.mxu0 0.0
    %244 = vmatpush1.msra.mxu0 0.0
    %245 = vmatprep.subr.mxu0 0.0
    %246 = vmatpush1.msra.mxu0 0.0
    %247 = vmatprep.subr.mxu0 0.0
    %248 = vmatpush1.msra.mxu0 0.0
    %249 = vmatprep.subr.mxu0 0.0
    %250 = vmatpush1.msra.mxu0 0.0
    %251 = vmatprep.subr.mxu0 0.0
    %252 = vmatpush1.msra.mxu0 0.0
    %253 = vmatprep.subr.mxu0 0.0
    %254 = vmatpush1.msra.mxu0 0.0
    %255 = vmatprep.subr.mxu0 0.0
    %256 = vmatpush1.msra.mxu0 0.0
    %257 = vmatprep.mubr.f32.mxu0 0.0
    %258 = vmatmul.mubr.f32.gmra.mrb[0].mxu0 %v168
    %v259 = vpop.f32.mrb[0].mxu0
    %v260 = vadd.f32 %v191, %v259
    %v261 = vpop.f32.mrb[0].mxu0
    %262 = vmatprep.mubr.f32.mxu0 0.0
    %263 = vmatmul.mubr.f32.gmra.mrb[0].mxu0 %v169
    %v264 = vpop.f32.mrb[0].mxu0
    %v265 = vadd.f32 %v191, %v264
    %v266 = vpop.f32.mrb[0].mxu0
    %267 = vdwg.mxu0
    %v268 = vld [vmem:[%s5] sm:$0x1]
    %v269 = vld [vmem:[%s6] sm:$0x1]
    %v270 = vlaneseq
    %v271 = vand.u32 %v270, 127
    %vm272 = vcmp.lt.s32.totalorder %v271, 32
    %v273 = vsel %vm272, %v260, 0.0
    %v274 = vsel %vm272, %v265, 0.0
    %275 = vadd.xlane.f32.xlu0 %v273
    %v276 = vpop.xlane.xlu0 %275
    %277 = vadd.xlane.f32.xlu0 %v274
    %v278 = vpop.xlane.xlu0 %277
    %v279 = vmul.f32 %v276, 0.03125
    %v280 = vmul.f32 %v278, 0.03125
    %v281 = vsub.f32 %v260, %v279
    %v282 = vsub.f32 %v265, %v280
    %v283 = vsel %vm272, %v281, 0.0
    %v284 = vsel %vm272, %v282, 0.0
    %v285 = vmul.f32 %v283, %v283
    %v286 = vmul.f32 %v284, %v284
    %287 = vadd.xlane.f32.xlu0 %v285
    %v288 = vpop.xlane.xlu0 %287
    %289 = vadd.xlane.f32.xlu0 %v286
    %v290 = vpop.xlane.xlu0 %289
    %v291 = vmul.f32 %v288, 0.032258064
    %v292 = vmul.f32 %v290, 0.032258064
    %v293 = vrsqrt.pop %v291
    %v294 = vmul.f32 %v291, %v293
    %vm295 = vcmp.eq.f32.partialorder %v291, inf
    %v296 = vsel %vm295, %v291, %v294
    %vm297 = vcmp.eq.f32.partialorder %v291, 0.0
    %v298 = vand.u32 %v291, 2147483648
    %v299 = vsel %vm297, %v298, %v296
    %v300 = vrsqrt.pop %v292
    %v301 = vmul.f32 %v292, %v300
    %vm302 = vcmp.eq.f32.partialorder %v292, inf
    %v303 = vsel %vm302, %v292, %v301
    %vm304 = vcmp.eq.f32.partialorder %v292, 0.0
    %v305 = vand.u32 %v292, 2147483648
    %v306 = vsel %vm304, %v305, %v303
    %v307 = vadd.f32 %v299, 1e-06
    %v308 = vadd.f32 %v306, 1e-06
    %v309 = vrcp.pop %v307
    %v310 = vrcp.pop %v308
    %v312 = vlaneseq
    %v313 = vshrl.u32 %v312, 7
    %v314 = vsub.s32 0, %v313
    %v315 = vrot.slane %v268, %v314
    %v317 = vmul.f32 %v315, %v309
    %v318 = vmul.f32 %v315, %v310
    %v319 = vmul.f32 %v283, %v317
    %v320 = vmul.f32 %v284, %v318
    %v322 = vlaneseq
    %v323 = vshrl.u32 %v322, 7
    %v324 = vsub.s32 0, %v323
    %v325 = vrot.slane %v269, %v324
    %v327 = vadd.f32 %v319, %v325
    %v328 = vadd.f32 %v320, %v325
    %329 = vst [vmem:[#allocation8] sm:$0xff] %v327
    %330 = vst [vmem:[#allocation8 + $0x8] sm:$0xff] %v328
    // Predicated region
    $region42: #{tpu_custom_call.1} parent=1 // pred_check
      _
    $region43: #{tpu_custom_call.1} parent=1 // pred_check_branch
      %332 = sbr.rel (0) target = $region45
    $region44: #{tpu_custom_call.1} parent=1 // pred_region
      %s334 = ssub.s32 256, 256
      %335 = vsyncadd [#allocation4], %s334
      %s336 = sshll.u32 [#allocation8], 4
      %s337 = int_to_ptr.vmem [resolvable:$true] %s336
      %342 = dma.vmem_to_hbm [thread:$0]  %s337, 256, %s7, [#allocation4], 128, 128, 8
    $region45: #{tpu_custom_call.1} parent=1 // pred_fallthru
      _
    // Predicated region
    $region46: #{tpu_custom_call.1} parent=1 // pred_check
      _
    $region47: #{tpu_custom_call.1} parent=1 // pred_check_branch
      %344 = sbr.rel (0) target = $region49
    $region48: #{tpu_custom_call.1} parent=1 // pred_region
      %345 = dma.done [#allocation4], 256
    $region49: #{tpu_custom_call.1} parent=1 // pred_fallthru
      _
    %346 = vsyncpa [#allocation3], 1
    %347 = vsyncpa [#allocation6], 1
    %348 = vsyncpa [#allocation4], 1

</llo_original>
